<compile_context>
chip_gen: v6e
topology: v6e:2x2x1
jax: 0.10.0
libtpu: 0.0.40
codegen_flags: <defaults>
</compile_context>

<pallas_src>
import math
from functools import partial

import numpy as np
import jax
import jax.numpy as jnp
from jax import lax
from jax.experimental import pallas as pl
from jax.experimental.pallas import tpu as pltpu

_VMEM_LIMIT_BYTES = 32 * 1024 * 1024   # explicit; safe on v5e/v6e (128 MiB) and v7x (64 MiB)
_TILE_BUDGET_BYTES = 20 * 1024 * 1024  # double-buffered in/out tiles + in-kernel f32 temps
_MAX_ROW_TILE = 1024                   # largest measured-useful tile for mem-bound kernels
_SEG_PAD = 128                         # one-hot stat matrices padded to a full lane tile


def _ln_kernel_simple(x_ref, g_ref, b_ref, o_ref, *, c, eps):
    """LayerNorm when C is a multiple of 128: direct lane reductions."""
    x = x_ref[...].astype(jnp.float32)                                  # (T, C)
    inv_c = jnp.float32(1.0 / c)
    mean = jnp.sum(x, axis=-1, keepdims=True) * inv_c
    var = jnp.sum(x * x, axis=-1, keepdims=True) * inv_c - mean * mean  # biased (div by C)
    inv = lax.rsqrt(var + eps)
    g = g_ref[...].astype(jnp.float32)
    b = b_ref[...].astype(jnp.float32)
    o_ref[...] = ((x - mean) * inv * g + b).astype(o_ref.dtype)


def _ln_kernel_packed(x_ref, g_ref, b_ref, s_ref, st_ref, o_ref, *, seg_len, eps):
    """LayerNorm on a lane-packed tile (C not a multiple of 128).

    x_ref : (T, W) tile, W = k*C, W % 128 == 0; each packed row holds k original
            rows of `seg_len` channels.
    s_ref : (W, 128) one-hot columns, S[j, s] = 1 iff j // seg_len == s (zero for s >= k).
    st_ref: (128, W) its transpose.
    Per-segment sum / sum-of-squares and the broadcast of the stats back across
    their lanes are single matmuls on the otherwise-idle MXU.
    """
    x = x_ref[...].astype(jnp.float32)                                  # (T, W)
    S = s_ref[...]
    S_T = st_ref[...]
    inv_c = jnp.float32(1.0 / seg_len)

    sums = jnp.dot(x, S, preferred_element_type=jnp.float32)            # (T, 128)
    sqs = jnp.dot(x * x, S, preferred_element_type=jnp.float32)         # (T, 128)
    mean = sums * inv_c
    var = sqs * inv_c - mean * mean                                     # biased (div by C)
    inv = lax.rsqrt(var + eps)                                          # padded cols finite

    mean_b = jnp.dot(mean, S_T, preferred_element_type=jnp.float32)     # (T, W)
    inv_b = jnp.dot(inv, S_T, preferred_element_type=jnp.float32)       # (T, W)

    g = g_ref[...].astype(jnp.float32)
    b = b_ref[...].astype(jnp.float32)
    o_ref[...] = ((x - mean_b) * inv_b * g + b).astype(o_ref.dtype)


def layer_norm_channels_last(x, gamma, beta, *, eps=1e-6, max_row_tile=_MAX_ROW_TILE):
    """LayerNorm over the last axis of `x`; matches
    F.layer_norm(x, (C,), gamma, beta, eps) with eps=1e-6 (ConvNeXt convention).
    Accepts any leading shape; normalizes each row of the flattened (N, C) view.
    """
    orig_shape = x.shape
    C = orig_shape[-1]
    N = math.prod(orig_shape[:-1]) if len(orig_shape) > 1 else 1
    feats = x.reshape(N, C)

    # Lane packing: pack k rows per packed row so the lane dim is a multiple of 128.
    k = 128 // math.gcd(C, 128)
    n_pad = (-N) % k
    if n_pad:
        feats = jnp.pad(feats, ((0, n_pad), (0, 0)))
    Np = N + n_pad
    rows = Np // k
    W = k * C
    packed = feats.reshape(rows, W)                 # contiguous -> free reshape

    g2 = jnp.tile(gamma.reshape(-1), (k,)).reshape(1, W)
    b2 = jnp.tile(beta.reshape(-1), (k,)).reshape(1, W)

    # Row tile: as large as the VMEM budget allows (mem-bound; big tiles amortize
    # the ~0.35 us per-grid-step overhead).
    itemsize = jnp.dtype(x.dtype).itemsize
    per_row = W * (4 * itemsize + 4 * 4) + 2 * _SEG_PAD * 4
    row_tile = max(8, (min(max_row_tile, _TILE_BUDGET_BYTES // per_row) // 8) * 8)
    row_tile = min(row_tile, rows)                  # == full dim when the array is tiny
    grid = (pl.cdiv(rows, row_tile),)               # partial last block handled by Pallas

    compiler_params = pltpu.CompilerParams(
        dimension_semantics=("parallel",),          # shards the grid across both TCs on v7x
        vmem_limit_bytes=_VMEM_LIMIT_BYTES,
    )

    if k == 1:
        kernel = partial(_ln_kernel_simple, c=C, eps=eps)
        out = pl.pallas_call(
            kernel,
            out_shape=jax.ShapeDtypeStruct((rows, W), x.dtype),
            grid_spec=pltpu.PrefetchScalarGridSpec(
                num_scalar_prefetch=0,
                grid=grid,
                in_specs=[
                    pl.BlockSpec((row_tile, W), lambda i: (i, 0)),   # features
                    pl.BlockSpec((1, W), lambda i: (0, 0)),          # gamma (resident)
                    pl.BlockSpec((1, W), lambda i: (0, 0)),          # beta  (resident)
                ],
                out_specs=pl.BlockSpec((row_tile, W), lambda i: (i, 0)),
            ),
            compiler_params=compiler_params,
        )(packed, g2, b2)
    else:
        # Host-side one-hot matrices, zero-padded to a full 128-lane tile so both
        # operands are perfectly (8,128)-aligned; padded columns/rows are zero and
        # contribute nothing.
        S_np = np.zeros((W, _SEG_PAD), dtype=np.float32)
        for s in range(k):
            S_np[s * C:(s + 1) * C, s] = 1.0
        S = jnp.asarray(S_np)
        S_T = jnp.asarray(np.ascontiguousarray(S_np.T))

        kernel = partial(_ln_kernel_packed, seg_len=C, eps=eps)
        out = pl.pallas_call(
            kernel,
            out_shape=jax.ShapeDtypeStruct((rows, W), x.dtype),
            grid_spec=pltpu.PrefetchScalarGridSpec(
                num_scalar_prefetch=0,
                grid=grid,
                in_specs=[
                    pl.BlockSpec((row_tile, W), lambda i: (i, 0)),      # packed features
                    pl.BlockSpec((1, W), lambda i: (0, 0)),             # gamma (resident)
                    pl.BlockSpec((1, W), lambda i: (0, 0)),             # beta  (resident)
                    pl.BlockSpec((W, _SEG_PAD), lambda i: (0, 0)),      # S     (resident)
                    pl.BlockSpec((_SEG_PAD, W), lambda i: (0, 0)),      # S^T   (resident)
                ],
                out_specs=pl.BlockSpec((row_tile, W), lambda i: (i, 0)),
            ),
            compiler_params=compiler_params,
        )(packed, g2, b2, S, S_T)

    out = out.reshape(Np, C)[:N]
    return out.reshape(orig_shape)


def layer_norm_channels_first(x, gamma, beta, *, eps=1e-6):
    """channels_first LayerNorm (used in the downsample layers): (B, C, H, W),
    normalized over C.  Same math as channels_last after an NCHW->NHWC transpose."""
    x_l = jnp.transpose(x, (0, 2, 3, 1))
    y = layer_norm_channels_last(x_l, gamma, beta, eps=eps)
    return jnp.transpose(y, (0, 3, 1, 2))


def _reference_layernorm(x, gamma, beta, eps=1e-6):
    xf = x.astype(jnp.float32)
    mean = jnp.mean(xf, axis=-1, keepdims=True)
    var = jnp.mean((xf - mean) ** 2, axis=-1, keepdims=True)
    y = (xf - mean) * lax.rsqrt(var + eps)
    y = y * gamma.astype(jnp.float32) + beta.astype(jnp.float32)
    return y.astype(x.dtype)


if __name__ == "__main__":
    key = jax.random.PRNGKey(0)
    k1, k2, k3, k4, k5 = jax.random.split(key, 5)

    # Case 1: the shape norm_0..norm_3 see — (B, H*W, embed_dim=192).
    # C=192 is not a multiple of 128 -> packed path (k=2, lane width 384).
    B, HW, C = 2, 64, 192
    x1 = jax.random.normal(k1, (B, HW, C), dtype=jnp.float32)
    g1 = 1.0 + 0.02 * jax.random.normal(k2, (C,), dtype=jnp.float32)
    b1 = 0.02 * jax.random.normal(k3, (C,), dtype=jnp.float32)
    out1 = jax.block_until_ready(layer_norm_channels_last(x1, g1, b1))
    ref1 = _reference_layernorm(x1, g1, b1)
    assert out1.shape == x1.shape
    assert jnp.allclose(out1, ref1, atol=2e-5, rtol=2e-5), "case 1 mismatch"

    # Case 2: C a multiple of 128 (simple path), row count not divisible by the
    # tile, small max_row_tile to exercise multi-step grid + partial last block.
    N2, C2 = 26, 384
    x2 = jax.random.normal(k4, (N2, C2), dtype=jnp.float32)
    g2 = jnp.ones((C2,), dtype=jnp.float32)
    b2 = jnp.zeros((C2,), dtype=jnp.float32)
    out2 = jax.block_until_ready(layer_norm_channels_last(x2, g2, b2, max_row_tile=16))
    ref2 = _reference_layernorm(x2, g2, b2)
    assert out2.shape == x2.shape
    assert jnp.allclose(out2, ref2, atol=2e-5, rtol=2e-5), "case 2 mismatch"

    # Case 3: channels_first LayerNorm (downsample layers): (B, C, H, W), C=192.
    x3 = jax.random.normal(k5, (2, C, 8, 8), dtype=jnp.float32)
    out3 = jax.block_until_ready(layer_norm_channels_first(x3, g1, b1))
    ref3 = jnp.transpose(
        _reference_layernorm(jnp.transpose(x3, (0, 2, 3, 1)), g1, b1), (0, 3, 1, 2))
    assert out3.shape == x3.shape
    assert jnp.allclose(out3, ref3, atol=2e-5, rtol=2e-5), "case 3 mismatch"

    print("KERNEL_OK")
</pallas_src>

<mosaic_0001>
module attributes {stable_mosaic.version = 11 : i64} {
  func.func @_ln_kernel_packed(%arg0: i32, %arg1: memref<64x384xf32, #tpu.memory_space<vmem>>, %arg2: memref<1x384xf32, #tpu.memory_space<vmem>>, %arg3: memref<1x384xf32, #tpu.memory_space<vmem>>, %arg4: memref<384x128xf32, #tpu.memory_space<vmem>>, %arg5: memref<128x384xf32, #tpu.memory_space<vmem>>, %arg6: memref<64x384xf32, #tpu.memory_space<vmem>>) attributes {dimension_semantics = [#tpu.dimension_semantics<parallel>], iteration_bounds = array<i64: 1>, scalar_prefetch = 0 : i64, scratch_operands = 0 : i64, tpu.core_type = #tpu.core_type<tc>, window_params = [{transform_indices = @transform_0, window_bounds = array<i64: 64, 384>}, {pipeline_mode = #tpu.pipeline_mode<synchronous>, transform_indices = @transform_1, window_bounds = array<i64: 1, 384>}, {pipeline_mode = #tpu.pipeline_mode<synchronous>, transform_indices = @transform_2, window_bounds = array<i64: 1, 384>}, {pipeline_mode = #tpu.pipeline_mode<synchronous>, transform_indices = @transform_3, window_bounds = array<i64: 384, 128>}, {pipeline_mode = #tpu.pipeline_mode<synchronous>, transform_indices = @transform_4, window_bounds = array<i64: 128, 384>}, {transform_indices = @transform_5, window_bounds = array<i64: 64, 384>}]} {
    %c0 = arith.constant 0 : index
    %c0_0 = arith.constant 0 : index
    %0 = vector.load %arg1[%c0, %c0_0] : memref<64x384xf32, #tpu.memory_space<vmem>>, vector<64x384xf32>
    %c0_1 = arith.constant 0 : index
    %c0_2 = arith.constant 0 : index
    %1 = vector.load %arg4[%c0_1, %c0_2] : memref<384x128xf32, #tpu.memory_space<vmem>>, vector<384x128xf32>
    %c0_3 = arith.constant 0 : index
    %c0_4 = arith.constant 0 : index
    %2 = vector.load %arg5[%c0_3, %c0_4] : memref<128x384xf32, #tpu.memory_space<vmem>>, vector<128x384xf32>
    %cst = arith.constant dense<0.000000e+00> : vector<64x128xf32>
    %3 = tpu.matmul %0, %1, %cst {dimension_numbers = #tpu.dot_dimension_numbers<[1], [0], [0], [1], [0, 0, 1, 1], [], []>} : vector<64x384xf32>, vector<384x128xf32>, vector<64x128xf32> -> vector<64x128xf32>
    %4 = arith.mulf %0, %0 : vector<64x384xf32>
    %cst_5 = arith.constant dense<0.000000e+00> : vector<64x128xf32>
    %5 = tpu.matmul %4, %1, %cst_5 {dimension_numbers = #tpu.dot_dimension_numbers<[1], [0], [0], [1], [0, 0, 1, 1], [], []>} : vector<64x384xf32>, vector<384x128xf32>, vector<64x128xf32> -> vector<64x128xf32>
    %cst_6 = arith.constant 0.00520833349 : f32
    %6 = vector.broadcast %cst_6 : f32 to vector<64x128xf32>
    %7 = arith.mulf %3, %6 : vector<64x128xf32>
    %cst_7 = arith.constant 0.00520833349 : f32
    %8 = vector.broadcast %cst_7 : f32 to vector<64x128xf32>
    %9 = arith.mulf %5, %8 : vector<64x128xf32>
    %10 = arith.mulf %7, %7 : vector<64x128xf32>
    %11 = arith.subf %9, %10 : vector<64x128xf32>
    %cst_8 = arith.constant 9.99999997E-7 : f32
    %12 = vector.broadcast %cst_8 : f32 to vector<64x128xf32>
    %13 = arith.addf %11, %12 : vector<64x128xf32>
    %14 = math.rsqrt %13 : vector<64x128xf32>
    %cst_9 = arith.constant dense<0.000000e+00> : vector<64x384xf32>
    %15 = tpu.matmul %7, %2, %cst_9 {dimension_numbers = #tpu.dot_dimension_numbers<[1], [0], [0], [1], [0, 0, 1, 1], [], []>} : vector<64x128xf32>, vector<128x384xf32>, vector<64x384xf32> -> vector<64x384xf32>
    %cst_10 = arith.constant dense<0.000000e+00> : vector<64x384xf32>
    %16 = tpu.matmul %14, %2, %cst_10 {dimension_numbers = #tpu.dot_dimension_numbers<[1], [0], [0], [1], [0, 0, 1, 1], [], []>} : vector<64x128xf32>, vector<128x384xf32>, vector<64x384xf32> -> vector<64x384xf32>
    %c0_11 = arith.constant 0 : index
    %c0_12 = arith.constant 0 : index
    %17 = vector.load %arg2[%c0_11, %c0_12] : memref<1x384xf32, #tpu.memory_space<vmem>>, vector<1x384xf32>
    %c0_13 = arith.constant 0 : index
    %c0_14 = arith.constant 0 : index
    %18 = vector.load %arg3[%c0_13, %c0_14] : memref<1x384xf32, #tpu.memory_space<vmem>>, vector<1x384xf32>
    %19 = arith.subf %0, %15 : vector<64x384xf32>
    %20 = arith.mulf %19, %16 : vector<64x384xf32>
    %21 = vector.broadcast %17 : vector<1x384xf32> to vector<64x384xf32>
    %22 = arith.mulf %20, %21 : vector<64x384xf32>
    %23 = vector.broadcast %18 : vector<1x384xf32> to vector<64x384xf32>
    %24 = arith.addf %22, %23 : vector<64x384xf32>
    %c0_15 = arith.constant 0 : index
    %c0_16 = arith.constant 0 : index
    %25 = vector.load %arg6[%c0_15, %c0_16] : memref<64x384xf32, #tpu.memory_space<vmem>>, vector<64x384xf32>
    tpu.vector_store %arg6[%c0_15, %c0_16], %24 {strides = array<i32>} : memref<64x384xf32, #tpu.memory_space<vmem>>, vector<64x384xf32>,
    return
  }
  func.func @transform_0(%arg0: i32) -> (i32, i32) {
    %c0_i32 = arith.constant 0 : i32
    %c0_i32_0 = arith.constant 0 : i32
    return %arg0, %c0_i32 : i32, i32
  }
  func.func @transform_1(%arg0: i32) -> (i32, i32) {
    %c0_i32 = arith.constant 0 : i32
    %c0_i32_0 = arith.constant 0 : i32
    %c0_i32_1 = arith.constant 0 : i32
    return %c0_i32, %c0_i32_0 : i32, i32
  }
  func.func @transform_2(%arg0: i32) -> (i32, i32) {
    %c0_i32 = arith.constant 0 : i32
    %c0_i32_0 = arith.constant 0 : i32
    %c0_i32_1 = arith.constant 0 : i32
    return %c0_i32, %c0_i32_0 : i32, i32
  }
  func.func @transform_3(%arg0: i32) -> (i32, i32) {
    %c0_i32 = arith.constant 0 : i32
    %c0_i32_0 = arith.constant 0 : i32
    %c0_i32_1 = arith.constant 0 : i32
    return %c0_i32, %c0_i32_0 : i32, i32
  }
  func.func @transform_4(%arg0: i32) -> (i32, i32) {
    %c0_i32 = arith.constant 0 : i32
    %c0_i32_0 = arith.constant 0 : i32
    %c0_i32_1 = arith.constant 0 : i32
    return %c0_i32, %c0_i32_0 : i32, i32
  }
  func.func @transform_5(%arg0: i32) -> (i32, i32) {
    %c0_i32 = arith.constant 0 : i32
    %c0_i32_0 = arith.constant 0 : i32
    return %arg0, %c0_i32 : i32, i32
  }
}

</mosaic_0001>

<llo_original>
// kernel: tpu_custom_call.1
$region0: #{tpu_custom_call.1}
  #allocation0 [shape = 'u32[]', space=smem, size = 0x4, offset = 0x4, fixed_abs, tag = 'smem constant byte address 0x4 - core index']
  #allocation1 [shape = 'u32[144,128]{1,0:T(1,128)}', space=vmem, size = 0x12000, scoped, tag = 'internal scratch']
  %s0 = inlined_call_operand.hbm [shape: f32[64,384], index: 0, kind: input, shape index: {}]
  %s1 = inlined_call_operand.hbm [shape: f32[1,384], index: 1, kind: input, shape index: {}]
  %s2 = inlined_call_operand.vmem [shape: f32[1,384], index: 2, kind: input, shape index: {}]
  %s3 = inlined_call_operand.hbm [shape: f32[384,128], index: 3, kind: input, shape index: {}]
  %s4 = inlined_call_operand.hbm [shape: f32[128,384], index: 4, kind: input, shape index: {}]
  %s5 = inlined_call_operand.hbm [shape: f32[64,384], index: 5, kind: output, shape index: {}]
  %s6 = sld [smem:[#allocation0]]
  $region46: #{tpu_custom_call.1} parent=0
    _
  %s8 = ssub.s32 1, %s6
  %s9 = scalar_select 0, %s8, %s6
  $region1: #{tpu_custom_call.1} parent=0
    #allocation2 [shape = 'u8[98304]{0}', space=vmem, size = 0x18000, scoped, tag = 'input window, operand 0, single buffered']
    #allocation3 [shape = 's32[1]{0}', space=sflag, size = 0x4, scoped, tag = 'scoped memory for tpu_custom_call.1']
    #allocation4 [shape = 's32[1]{0}', space=sflag, size = 0x4, scoped, tag = 'scoped memory for tpu_custom_call.1']
    #allocation5 [shape = 'u8[1536]{0}', space=vmem, size = 0x800, scoped, tag = 'input window, operand 1, single buffered']
    #allocation6 [shape = 's32[1]{0}', space=sflag, size = 0x4, scoped, tag = 'scoped memory for tpu_custom_call.1']
    #allocation7 [shape = 'u8[196608]{0}', space=vmem, size = 0x30000, scoped, tag = 'input window, operand 3, single buffered']
    #allocation8 [shape = 'u8[196608]{0}', space=vmem, size = 0x30000, scoped, tag = 'input window, operand 4, single buffered']
    #allocation9 [shape = 's32[1]{0}', space=sflag, size = 0x4, scoped, tag = 'scoped memory for tpu_custom_call.1']
    #allocation10 [shape = 'u8[98304]{0}', space=vmem, size = 0x18000, scoped, tag = 'output window, operand 0, single buffered']
    %10 = vsyncpa [#allocation3], 0
    %11 = vsyncpa [#allocation6], 0
    %12 = vsyncpa [#allocation9], 0
    %13 = vsyncpa [#allocation4], 0
    // Predicated region
    $region2: #{tpu_custom_call.1} parent=1 // pred_check
      _
    $region3: #{tpu_custom_call.1} parent=1 // pred_check_branch
      %15 = sbr.rel (0) target = $region5
    $region4: #{tpu_custom_call.1} parent=1 // pred_region
      %s17 = ssub.s32 3072, 3072
      %18 = vsyncadd [#allocation3], %s17
      %s19 = sshll.u32 [#allocation2], 4
      %s20 = int_to_ptr.vmem [resolvable:$true] %s19
      %25 = dma.hbm_to_vmem [thread:$0]  %s0, 3072, %s20, [#allocation3], 384, 384, 24
    $region5: #{tpu_custom_call.1} parent=1 // pred_fallthru
      _
    // Predicated region
    $region6: #{tpu_custom_call.1} parent=1 // pred_check
      _
    $region7: #{tpu_custom_call.1} parent=1 // pred_check_branch
      %27 = sbr.rel (0) target = $region9
    $region8: #{tpu_custom_call.1} parent=1 // pred_region
      %s29 = ssub.s32 48, 48
      %30 = vsyncadd [#allocation6], %s29
      %s32 = sshll.u32 [#allocation5], 4
      %s33 = int_to_ptr.vmem [resolvable:$true] %s32
      %35 = dma.hbm_to_vmem [thread:$0]  %s1, 48, %s33, [#allocation6]
    $region9: #{tpu_custom_call.1} parent=1 // pred_fallthru
      _
    // Predicated region
    $region10: #{tpu_custom_call.1} parent=1 // pred_check
      _
    $region11: #{tpu_custom_call.1} parent=1 // pred_check_branch
      %37 = sbr.rel (0) target = $region13
    $region12: #{tpu_custom_call.1} parent=1 // pred_region
      _
    $region13: #{tpu_custom_call.1} parent=1 // pred_fallthru
      _
    // Predicated region
    $region14: #{tpu_custom_call.1} parent=1 // pred_check
      _
    $region15: #{tpu_custom_call.1} parent=1 // pred_check_branch
      %39 = sbr.rel (0) target = $region17
    $region16: #{tpu_custom_call.1} parent=1 // pred_region
      %s41 = ssub.s32 6144, 6144
      %42 = vsyncadd [#allocation6], %s41
      %s43 = sshll.u32 [#allocation7], 4
      %s44 = int_to_ptr.vmem [resolvable:$true] %s43
      %49 = dma.hbm_to_vmem [thread:$0]  %s3, 6144, %s44, [#allocation6], 128, 128, 8
    $region17: #{tpu_custom_call.1} parent=1 // pred_fallthru
      _
    // Predicated region
    $region18: #{tpu_custom_call.1} parent=1 // pred_check
      _
    $region19: #{tpu_custom_call.1} parent=1 // pred_check_branch
      %51 = sbr.rel (0) target = $region21
    $region20: #{tpu_custom_call.1} parent=1 // pred_region
      %s53 = ssub.s32 6144, 6144
      %54 = vsyncadd [#allocation9], %s53
      %s55 = sshll.u32 [#allocation8], 4
      %s56 = int_to_ptr.vmem [resolvable:$true] %s55
      %61 = dma.hbm_to_vmem [thread:$0]  %s4, 6144, %s56, [#allocation9], 384, 384, 24
    $region21: #{tpu_custom_call.1} parent=1 // pred_fallthru
      _
    // Predicated region
    $region22: #{tpu_custom_call.1} parent=1 // pred_check
      _
    $region23: #{tpu_custom_call.1} parent=1 // pred_check_branch
      %63 = sbr.rel (0) target = $region25
    $region24: #{tpu_custom_call.1} parent=1 // pred_region
      %64 = dma.done [#allocation3], 3072
    $region25: #{tpu_custom_call.1} parent=1 // pred_fallthru
      _
    // Predicated region
    $region26: #{tpu_custom_call.1} parent=1 // pred_check
      _
    $region27: #{tpu_custom_call.1} parent=1 // pred_check_branch
      %66 = sbr.rel (0) target = $region29
    $region28: #{tpu_custom_call.1} parent=1 // pred_region
      %67 = dma.done [#allocation6], 48
    $region29: #{tpu_custom_call.1} parent=1 // pred_fallthru
      _
    // Predicated region
    $region30: #{tpu_custom_call.1} parent=1 // pred_check
      _
    $region31: #{tpu_custom_call.1} parent=1 // pred_check_branch
      %69 = sbr.rel (0) target = $region33
    $region32: #{tpu_custom_call.1} parent=1 // pred_region
      %70 = dma.done [#allocation6], 6144
    $region33: #{tpu_custom_call.1} parent=1 // pred_fallthru
      _
    // Predicated region
    $region34: #{tpu_custom_call.1} parent=1 // pred_check
      _
    $region35: #{tpu_custom_call.1} parent=1 // pred_check_branch
      %72 = sbr.rel (0) target = $region37
    $region36: #{tpu_custom_call.1} parent=1 // pred_region
      %73 = dma.done [#allocation9], 6144
    $region37: #{tpu_custom_call.1} parent=1 // pred_fallthru
      _
    %v74 = vld [vmem:[#allocation2] sm:$0xff]
    %v75 = vld [vmem:[#allocation2 + $0x8] sm:$0xff]
    %v76 = vld [vmem:[#allocation2 + $0x10] sm:$0xff]
    %v77 = vld [vmem:[#allocation2 + $0x18] sm:$0xff]
    %v78 = vld [vmem:[#allocation2 + $0x20] sm:$0xff]
    %v79 = vld [vmem:[#allocation2 + $0x28] sm:$0xff]
    %v80 = vld [vmem:[#allocation2 + $0x30] sm:$0xff]
    %v81 = vld [vmem:[#allocation2 + $0x38] sm:$0xff]
    %v82 = vld [vmem:[#allocation2 + $0x40] sm:$0xff]
    %v83 = vld [vmem:[#allocation2 + $0x48] sm:$0xff]
    %v84 = vld [vmem:[#allocation2 + $0x50] sm:$0xff]
    %v85 = vld [vmem:[#allocation2 + $0x58] sm:$0xff]
    %v86 = vld [vmem:[#allocation2 + $0x60] sm:$0xff]
    %v87 = vld [vmem:[#allocation2 + $0x68] sm:$0xff]
    %v88 = vld [vmem:[#allocation2 + $0x70] sm:$0xff]
    %v89 = vld [vmem:[#allocation2 + $0x78] sm:$0xff]
    %v90 = vld [vmem:[#allocation2 + $0x80] sm:$0xff]
    %v91 = vld [vmem:[#allocation2 + $0x88] sm:$0xff]
    %v92 = vld [vmem:[#allocation2 + $0x90] sm:$0xff]
    %v93 = vld [vmem:[#allocation2 + $0x98] sm:$0xff]
    %v94 = vld [vmem:[#allocation2 + $0xa0] sm:$0xff]
    %v95 = vld [vmem:[#allocation2 + $0xa8] sm:$0xff]
    %v96 = vld [vmem:[#allocation2 + $0xb0] sm:$0xff]
    %v97 = vld [vmem:[#allocation2 + $0xb8] sm:$0xff]
    %v98 = vld [vmem:[#allocation7] sm:$0xff]
    %v99 = vld [vmem:[#allocation7 + $0x8] sm:$0xff]
    %v100 = vld [vmem:[#allocation7 + $0x10] sm:$0xff]
    %v101 = vld [vmem:[#allocation7 + $0x18] sm:$0xff]
    %v102 = vld [vmem:[#allocation7 + $0x20] sm:$0xff]
    %v103 = vld [vmem:[#allocation7 + $0x28] sm:$0xff]
    %v104 = vld [vmem:[#allocation7 + $0x30] sm:$0xff]
    %v105 = vld [vmem:[#allocation7 + $0x38] sm:$0xff]
    %v106 = vld [vmem:[#allocation7 + $0x40] sm:$0xff]
    %v107 = vld [vmem:[#allocation7 + $0x48] sm:$0xff]
    %v108 = vld [vmem:[#allocation7 + $0x50] sm:$0xff]
    %v109 = vld [vmem:[#allocation7 + $0x58] sm:$0xff]
    %v110 = vld [vmem:[#allocation7 + $0x60] sm:$0xff]
    %v111 = vld [vmem:[#allocation7 + $0x68] sm:$0xff]
    %v112 = vld [vmem:[#allocation7 + $0x70] sm:$0xff]
    %v113 = vld [vmem:[#allocation7 + $0x78] sm:$0xff]
    %v114 = vld [vmem:[#allocation7 + $0x80] sm:$0xff]
    %v115 = vld [vmem:[#allocation7 + $0x88] sm:$0xff]
    %v116 = vld [vmem:[#allocation7 + $0x90] sm:$0xff]
    %v117 = vld [vmem:[#allocation7 + $0x98] sm:$0xff]
    %v118 = vld [vmem:[#allocation7 + $0xa0] sm:$0xff]
    %v119 = vld [vmem:[#allocation7 + $0xa8] sm:$0xff]
    %v120 = vld [vmem:[#allocation7 + $0xb0] sm:$0xff]
    %v121 = vld [vmem:[#allocation7 + $0xb8] sm:$0xff]
    %v122 = vld [vmem:[#allocation7 + $0xc0] sm:$0xff]
    %v123 = vld [vmem:[#allocation7 + $0xc8] sm:$0xff]
    %v124 = vld [vmem:[#allocation7 + $0xd0] sm:$0xff]
    %v125 = vld [vmem:[#allocation7 + $0xd8] sm:$0xff]
    %v126 = vld [vmem:[#allocation7 + $0xe0] sm:$0xff]
    %v127 = vld [vmem:[#allocation7 + $0xe8] sm:$0xff]
    %v128 = vld [vmem:[#allocation7 + $0xf0] sm:$0xff]
    %v129 = vld [vmem:[#allocation7 + $0xf8] sm:$0xff]
    %v130 = vld [vmem:[#allocation7 + $0x100] sm:$0xff]
    %v131 = vld [vmem:[#allocation7 + $0x108] sm:$0xff]
    %v132 = vld [vmem:[#allocation7 + $0x110] sm:$0xff]
    %v133 = vld [vmem:[#allocation7 + $0x118] sm:$0xff]
    %v134 = vld [vmem:[#allocation7 + $0x120] sm:$0xff]
    %v135 = vld [vmem:[#allocation7 + $0x128] sm:$0xff]
    %v136 = vld [vmem:[#allocation7 + $0x130] sm:$0xff]
    %v137 = vld [vmem:[#allocation7 + $0x138] sm:$0xff]
    %v138 = vld [vmem:[#allocation7 + $0x140] sm:$0xff]
    %v139 = vld [vmem:[#allocation7 + $0x148] sm:$0xff]
    %v140 = vld [vmem:[#allocation7 + $0x150] sm:$0xff]
    %v141 = vld [vmem:[#allocation7 + $0x158] sm:$0xff]
    %v142 = vld [vmem:[#allocation7 + $0x160] sm:$0xff]
    %v143 = vld [vmem:[#allocation7 + $0x168] sm:$0xff]
    %v144 = vld [vmem:[#allocation7 + $0x170] sm:$0xff]
    %v145 = vld [vmem:[#allocation7 + $0x178] sm:$0xff]
    %v146 = vld [vmem:[#allocation8] sm:$0xff]
    %v147 = vld [vmem:[#allocation8 + $0x8] sm:$0xff]
    %v148 = vld [vmem:[#allocation8 + $0x10] sm:$0xff]
    %v149 = vld [vmem:[#allocation8 + $0x18] sm:$0xff]
    %v150 = vld [vmem:[#allocation8 + $0x20] sm:$0xff]
    %v151 = vld [vmem:[#allocation8 + $0x28] sm:$0xff]
    %v152 = vld [vmem:[#allocation8 + $0x30] sm:$0xff]
    %v153 = vld [vmem:[#allocation8 + $0x38] sm:$0xff]
    %v154 = vld [vmem:[#allocation8 + $0x40] sm:$0xff]
    %v155 = vld [vmem:[#allocation8 + $0x48] sm:$0xff]
    %v156 = vld [vmem:[#allocation8 + $0x50] sm:$0xff]
    %v157 = vld [vmem:[#allocation8 + $0x58] sm:$0xff]
    %v158 = vld [vmem:[#allocation8 + $0x60] sm:$0xff]
    %v159 = vld [vmem:[#allocation8 + $0x68] sm:$0xff]
    %v160 = vld [vmem:[#allocation8 + $0x70] sm:$0xff]
    %v161 = vld [vmem:[#allocation8 + $0x78] sm:$0xff]
    %v162 = vld [vmem:[#allocation8 + $0x80] sm:$0xff]
    %v163 = vld [vmem:[#allocation8 + $0x88] sm:$0xff]
    %v164 = vld [vmem:[#allocation8 + $0x90] sm:$0xff]
    %v165 = vld [vmem:[#allocation8 + $0x98] sm:$0xff]
    %v166 = vld [vmem:[#allocation8 + $0xa0] sm:$0xff]
    %v167 = vld [vmem:[#allocation8 + $0xa8] sm:$0xff]
    %v168 = vld [vmem:[#allocation8 + $0xb0] sm:$0xff]
    %v169 = vld [vmem:[#allocation8 + $0xb8] sm:$0xff]
    %v170 = vld [vmem:[#allocation8 + $0xc0] sm:$0xff]
    %v171 = vld [vmem:[#allocation8 + $0xc8] sm:$0xff]
    %v172 = vld [vmem:[#allocation8 + $0xd0] sm:$0xff]
    %v173 = vld [vmem:[#allocation8 + $0xd8] sm:$0xff]
    %v174 = vld [vmem:[#allocation8 + $0xe0] sm:$0xff]
    %v175 = vld [vmem:[#allocation8 + $0xe8] sm:$0xff]
    %v176 = vld [vmem:[#allocation8 + $0xf0] sm:$0xff]
    %v177 = vld [vmem:[#allocation8 + $0xf8] sm:$0xff]
    %v178 = vld [vmem:[#allocation8 + $0x100] sm:$0xff]
    %v179 = vld [vmem:[#allocation8 + $0x108] sm:$0xff]
    %v180 = vld [vmem:[#allocation8 + $0x110] sm:$0xff]
    %v181 = vld [vmem:[#allocation8 + $0x118] sm:$0xff]
    %v182 = vld [vmem:[#allocation8 + $0x120] sm:$0xff]
    %v183 = vld [vmem:[#allocation8 + $0x128] sm:$0xff]
    %v184 = vld [vmem:[#allocation8 + $0x130] sm:$0xff]
    %v185 = vld [vmem:[#allocation8 + $0x138] sm:$0xff]
    %v186 = vld [vmem:[#allocation8 + $0x140] sm:$0xff]
    %v187 = vld [vmem:[#allocation8 + $0x148] sm:$0xff]
    %v188 = vld [vmem:[#allocation8 + $0x150] sm:$0xff]
    %v189 = vld [vmem:[#allocation8 + $0x158] sm:$0xff]
    %v190 = vld [vmem:[#allocation8 + $0x160] sm:$0xff]
    %v191 = vld [vmem:[#allocation8 + $0x168] sm:$0xff]
    %v192 = vld [vmem:[#allocation8 + $0x170] sm:$0xff]
    %v193 = vld [vmem:[#allocation8 + $0x178] sm:$0xff]
    %194 = vmatprep.subr.mxu0 0.0
    %195 = vmatpush1.msra.mxu0 %v113
    %196 = vmatprep.subr.mxu0 0.0
    %197 = vmatpush1.msra.mxu0 %v112
    %198 = vmatprep.subr.mxu0 0.0
    %199 = vmatpush1.msra.mxu0 %v111
    %200 = vmatprep.subr.mxu0 0.0
    %201 = vmatpush1.msra.mxu0 %v110
    %202 = vmatprep.subr.mxu0 0.0
    %203 = vmatpush1.msra.mxu0 %v109
    %204 = vmatprep.subr.mxu0 0.0
    %205 = vmatpush1.msra.mxu0 %v108
    %206 = vmatprep.subr.mxu0 0.0
    %207 = vmatpush1.msra.mxu0 %v107
    %208 = vmatprep.subr.mxu0 0.0
    %209 = vmatpush1.msra.mxu0 %v106
    %210 = vmatprep.subr.mxu0 0.0
    %211 = vmatpush1.msra.mxu0 %v105
    %212 = vmatprep.subr.mxu0 0.0
    %213 = vmatpush1.msra.mxu0 %v104
    %214 = vmatprep.subr.mxu0 0.0
    %215 = vmatpush1.msra.mxu0 %v103
    %216 = vmatprep.subr.mxu0 0.0
    %217 = vmatpush1.msra.mxu0 %v102
    %218 = vmatprep.subr.mxu0 0.0
    %219 = vmatpush1.msra.mxu0 %v101
    %220 = vmatprep.subr.mxu0 0.0
    %221 = vmatpush1.msra.mxu0 %v100
    %222 = vmatprep.subr.mxu0 0.0
    %223 = vmatpush1.msra.mxu0 %v99
    %224 = vmatprep.subr.mxu0 0.0
    %225 = vmatpush1.msra.mxu0 %v98
    %226 = vmatprep.subr.mxu0 0.0
    %227 = vmatpush2.msra.mxu0 %v129
    %228 = vmatprep.subr.mxu0 0.0
    %229 = vmatpush2.msra.mxu0 %v128
    %230 = vmatprep.subr.mxu0 0.0
    %231 = vmatpush2.msra.mxu0 %v127
    %232 = vmatprep.subr.mxu0 0.0
    %233 = vmatpush2.msra.mxu0 %v126
    %234 = vmatprep.subr.mxu0 0.0
    %235 = vmatpush2.msra.mxu0 %v125
    %236 = vmatprep.subr.mxu0 0.0
    %237 = vmatpush2.msra.mxu0 %v124
    %238 = vmatprep.subr.mxu0 0.0
    %239 = vmatpush2.msra.mxu0 %v123
    %240 = vmatprep.subr.mxu0 0.0
    %241 = vmatpush2.msra.mxu0 %v122
    %242 = vmatprep.subr.mxu0 0.0
    %243 = vmatpush2.msra.mxu0 %v121
    %244 = vmatprep.subr.mxu0 0.0
    %245 = vmatpush2.msra.mxu0 %v120
    %246 = vmatprep.subr.mxu0 0.0
    %247 = vmatpush2.msra.mxu0 %v119
    %248 = vmatprep.subr.mxu0 0.0
    %249 = vmatpush2.msra.mxu0 %v118
    %250 = vmatprep.subr.mxu0 0.0
    %251 = vmatpush2.msra.mxu0 %v117
    %252 = vmatprep.subr.mxu0 0.0
    %253 = vmatpush2.msra.mxu0 %v116
    %254 = vmatprep.subr.mxu0 0.0
    %255 = vmatpush2.msra.mxu0 %v115
    %256 = vmatprep.subr.mxu0 0.0
    %257 = vmatpush2.msra.mxu0 %v114
    %258 = vmatprep.mubr.f32.mxu0 %v75
    %259 = vmatmul.mubr.f32.gmra.mxu0 %v74
    %v260 = vpop.f32.mrf.mxu0
    %v261 = vadd.f32 0.0, %v260
    %v262 = vpop.f32.mrf.mxu0
    %263 = vmatprep.mubr.f32.mxu0 %v78
    %264 = vmatmul.mubr.f32.gmra.mxu0 %v77
    %v265 = vpop.f32.mrf.mxu0
    %v266 = vadd.f32 0.0, %v265
    %v267 = vpop.f32.mrf.mxu0
    %268 = vmatprep.mubr.f32.mxu0 %v81
    %269 = vmatmul.mubr.f32.gmra.mxu0 %v80
    %v270 = vpop.f32.mrf.mxu0
    %v271 = vadd.f32 0.0, %v270
    %v272 = vpop.f32.mrf.mxu0
    %273 = vmatprep.mubr.f32.mxu0 %v84
    %274 = vmatmul.mubr.f32.gmra.mxu0 %v83
    %v275 = vpop.f32.mrf.mxu0
    %v276 = vadd.f32 0.0, %v275
    %v277 = vpop.f32.mrf.mxu0
    %278 = vmatprep.mubr.f32.mxu0 %v87
    %279 = vmatmul.mubr.f32.gmra.mxu0 %v86
    %v280 = vpop.f32.mrf.mxu0
    %v281 = vadd.f32 0.0, %v280
    %v282 = vpop.f32.mrf.mxu0
    %283 = vmatprep.mubr.f32.mxu0 %v90
    %284 = vmatmul.mubr.f32.gmra.mxu0 %v89
    %v285 = vpop.f32.mrf.mxu0
    %v286 = vadd.f32 0.0, %v285
    %v287 = vpop.f32.mrf.mxu0
    %288 = vmatprep.mubr.f32.mxu0 %v93
    %289 = vmatmul.mubr.f32.gmra.mxu0 %v92
    %v290 = vpop.f32.mrf.mxu0
    %v291 = vadd.f32 0.0, %v290
    %v292 = vpop.f32.mrf.mxu0
    %293 = vmatprep.mubr.f32.mxu0 %v96
    %294 = vmatmul.mubr.f32.gmra.mxu0 %v95
    %v295 = vpop.f32.mrf.mxu0
    %v296 = vadd.f32 0.0, %v295
    %v297 = vpop.f32.mrf.mxu0
    %298 = vdwg.mxu0
    %299 = vmatprep.subr.mxu0 0.0
    %300 = vmatpush1.msra.mxu0 %v145
    %301 = vmatprep.subr.mxu0 0.0
    %302 = vmatpush1.msra.mxu0 %v144
    %303 = vmatprep.subr.mxu0 0.0
    %304 = vmatpush1.msra.mxu0 %v143
    %305 = vmatprep.subr.mxu0 0.0
    %306 = vmatpush1.msra.mxu0 %v142
    %307 = vmatprep.subr.mxu0 0.0
    %308 = vmatpush1.msra.mxu0 %v141
    %309 = vmatprep.subr.mxu0 0.0
    %310 = vmatpush1.msra.mxu0 %v140
    %311 = vmatprep.subr.mxu0 0.0
    %312 = vmatpush1.msra.mxu0 %v139
    %313 = vmatprep.subr.mxu0 0.0
    %314 = vmatpush1.msra.mxu0 %v138
    %315 = vmatprep.subr.mxu0 0.0
    %316 = vmatpush1.msra.mxu0 %v137
    %317 = vmatprep.subr.mxu0 0.0
    %318 = vmatpush1.msra.mxu0 %v136
    %319 = vmatprep.subr.mxu0 0.0
    %320 = vmatpush1.msra.mxu0 %v135
    %321 = vmatprep.subr.mxu0 0.0
    %322 = vmatpush1.msra.mxu0 %v134
    %323 = vmatprep.subr.mxu0 0.0
    %324 = vmatpush1.msra.mxu0 %v133
    %325 = vmatprep.subr.mxu0 0.0
    %326 = vmatpush1.msra.mxu0 %v132
    %327 = vmatprep.subr.mxu0 0.0
    %328 = vmatpush1.msra.mxu0 %v131
    %329 = vmatprep.subr.mxu0 0.0
    %330 = vmatpush1.msra.mxu0 %v130
    %331 = vmatprep.subr.mxu0 0.0
    %332 = vmatpush2.msra.mxu0 0.0
    %333 = vmatprep.subr.mxu0 0.0
    %334 = vmatpush2.msra.mxu0 0.0
    %335 = vmatprep.subr.mxu0 0.0
    %336 = vmatpush2.msra.mxu0 0.0
    %337 = vmatprep.subr.mxu0 0.0
    %338 = vmatpush2.msra.mxu0 0.0
    %339 = vmatprep.subr.mxu0 0.0
    %340 = vmatpush2.msra.mxu0 0.0
    %341 = vmatprep.subr.mxu0 0.0
    %342 = vmatpush2.msra.mxu0 0.0
    %343 = vmatprep.subr.mxu0 0.0
    %344 = vmatpush2.msra.mxu0 0.0
    %345 = vmatprep.subr.mxu0 0.0
    %346 = vmatpush2.msra.mxu0 0.0
    %347 = vmatprep.subr.mxu0 0.0
    %348 = vmatpush2.msra.mxu0 0.0
    %349 = vmatprep.subr.mxu0 0.0
    %350 = vmatpush2.msra.mxu0 0.0
    %351 = vmatprep.subr.mxu0 0.0
    %352 = vmatpush2.msra.mxu0 0.0
    %353 = vmatprep.subr.mxu0 0.0
    %354 = vmatpush2.msra.mxu0 0.0
    %355 = vmatprep.subr.mxu0 0.0
    %356 = vmatpush2.msra.mxu0 0.0
    %357 = vmatprep.subr.mxu0 0.0
    %358 = vmatpush2.msra.mxu0 0.0
    %359 = vmatprep.subr.mxu0 0.0
    %360 = vmatpush2.msra.mxu0 0.0
    %361 = vmatprep.subr.mxu0 0.0
    %362 = vmatpush2.msra.mxu0 0.0
    %363 = vmatprep.mubr.f32.mxu0 0.0
    %364 = vmatmul.mubr.f32.gmra.mxu0 %v76
    %v365 = vpop.f32.mrf.mxu0
    %v366 = vadd.f32 %v261, %v365
    %v367 = vpop.f32.mrf.mxu0
    %368 = vmatprep.mubr.f32.mxu0 0.0
    %369 = vmatmul.mubr.f32.gmra.mxu0 %v79
    %v370 = vpop.f32.mrf.mxu0
    %v371 = vadd.f32 %v266, %v370
    %v372 = vpop.f32.mrf.mxu0
    %373 = vmatprep.mubr.f32.mxu0 0.0
    %374 = vmatmul.mubr.f32.gmra.mxu0 %v82
    %v375 = vpop.f32.mrf.mxu0
    %v376 = vadd.f32 %v271, %v375
    %v377 = vpop.f32.mrf.mxu0
    %378 = vmatprep.mubr.f32.mxu0 0.0
    %379 = vmatmul.mubr.f32.gmra.mxu0 %v85
    %v380 = vpop.f32.mrf.mxu0
    %v381 = vadd.f32 %v276, %v380
    %v382 = vpop.f32.mrf.mxu0
    %383 = vmatprep.mubr.f32.mxu0 0.0
    %384 = vmatmul.mubr.f32.gmra.mxu0 %v88
    %v385 = vpop.f32.mrf.mxu0
    %v386 = vadd.f32 %v281, %v385
    %v387 = vpop.f32.mrf.mxu0
    %388 = vmatprep.mubr.f32.mxu0 0.0
    %389 = vmatmul.mubr.f32.gmra.mxu0 %v91
    %v390 = vpop.f32.mrf.mxu0
    %v391 = vadd.f32 %v286, %v390
    %v392 = vpop.f32.mrf.mxu0
    %393 = vmatprep.mubr.f32.mxu0 0.0
    %394 = vmatmul.mubr.f32.gmra.mxu0 %v94
    %v395 = vpop.f32.mrf.mxu0
    %v396 = vadd.f32 %v291, %v395
    %v397 = vpop.f32.mrf.mxu0
    %398 = vmatprep.mubr.f32.mxu0 0.0
    %399 = vmatmul.mubr.f32.gmra.mxu0 %v97
    %v400 = vpop.f32.mrf.mxu0
    %v401 = vadd.f32 %v296, %v400
    %v402 = vpop.f32.mrf.mxu0
    %403 = vdwg.mxu0
    %v404 = vmul.f32 %v74, %v74
    %v405 = vmul.f32 %v75, %v75
    %v406 = vmul.f32 %v76, %v76
    %v407 = vmul.f32 %v77, %v77
    %v408 = vmul.f32 %v78, %v78
    %v409 = vmul.f32 %v79, %v79
    %v410 = vmul.f32 %v80, %v80
    %v411 = vmul.f32 %v81, %v81
    %v412 = vmul.f32 %v82, %v82
    %v413 = vmul.f32 %v83, %v83
    %v414 = vmul.f32 %v84, %v84
    %v415 = vmul.f32 %v85, %v85
    %v416 = vmul.f32 %v86, %v86
    %v417 = vmul.f32 %v87, %v87
    %v418 = vmul.f32 %v88, %v88
    %v419 = vmul.f32 %v89, %v89
    %v420 = vmul.f32 %v90, %v90
    %v421 = vmul.f32 %v91, %v91
    %v422 = vmul.f32 %v92, %v92
    %v423 = vmul.f32 %v93, %v93
    %v424 = vmul.f32 %v94, %v94
    %v425 = vmul.f32 %v95, %v95
    %v426 = vmul.f32 %v96, %v96
    %v427 = vmul.f32 %v97, %v97
    %428 = vmatprep.subr.mxu0 0.0
    %429 = vmatpush1.msra.mxu0 %v113
    %430 = vmatprep.subr.mxu0 0.0
    %431 = vmatpush1.msra.mxu0 %v112
    %432 = vmatprep.subr.mxu0 0.0
    %433 = vmatpush1.msra.mxu0 %v111
    %434 = vmatprep.subr.mxu0 0.0
    %435 = vmatpush1.msra.mxu0 %v110
    %436 = vmatprep.subr.mxu0 0.0
    %437 = vmatpush1.msra.mxu0 %v109
    %438 = vmatprep.subr.mxu0 0.0
    %439 = vmatpush1.msra.mxu0 %v108
    %440 = vmatprep.subr.mxu0 0.0
    %441 = vmatpush1.msra.mxu0 %v107
    %442 = vmatprep.subr.mxu0 0.0
    %443 = vmatpush1.msra.mxu0 %v106
    %444 = vmatprep.subr.mxu0 0.0
    %445 = vmatpush1.msra.mxu0 %v105
    %446 = vmatprep.subr.mxu0 0.0
    %447 = vmatpush1.msra.mxu0 %v104
    %448 = vmatprep.subr.mxu0 0.0
    %449 = vmatpush1.msra.mxu0 %v103
    %450 = vmatprep.subr.mxu0 0.0
    %451 = vmatpush1.msra.mxu0 %v102
    %452 = vmatprep.subr.mxu0 0.0
    %453 = vmatpush1.msra.mxu0 %v101
    %454 = vmatprep.subr.mxu0 0.0
    %455 = vmatpush1.msra.mxu0 %v100
    %456 = vmatprep.subr.mxu0 0.0
    %457 = vmatpush1.msra.mxu0 %v99
    %458 = vmatprep.subr.mxu0 0.0
    %459 = vmatpush1.msra.mxu0 %v98
    %460 = vmatprep.subr.mxu0 0.0
    %461 = vmatpush2.msra.mxu0 %v129
    %462 = vmatprep.subr.mxu0 0.0
    %463 = vmatpush2.msra.mxu0 %v128
    %464 = vmatprep.subr.mxu0 0.0
    %465 = vmatpush2.msra.mxu0 %v127
    %466 = vmatprep.subr.mxu0 0.0
    %467 = vmatpush2.msra.mxu0 %v126
    %468 = vmatprep.subr.mxu0 0.0
    %469 = vmatpush2.msra.mxu0 %v125
    %470 = vmatprep.subr.mxu0 0.0
    %471 = vmatpush2.msra.mxu0 %v124
    %472 = vmatprep.subr.mxu0 0.0
    %473 = vmatpush2.msra.mxu0 %v123
    %474 = vmatprep.subr.mxu0 0.0
    %475 = vmatpush2.msra.mxu0 %v122
    %476 = vmatprep.subr.mxu0 0.0
    %477 = vmatpush2.msra.mxu0 %v121
    %478 = vmatprep.subr.mxu0 0.0
    %479 = vmatpush2.msra.mxu0 %v120
    %480 = vmatprep.subr.mxu0 0.0
    %481 = vmatpush2.msra.mxu0 %v119
    %482 = vmatprep.subr.mxu0 0.0
    %483 = vmatpush2.msra.mxu0 %v118
    %484 = vmatprep.subr.mxu0 0.0
    %485 = vmatpush2.msra.mxu0 %v117
    %486 = vmatprep.subr.mxu0 0.0
    %487 = vmatpush2.msra.mxu0 %v116
    %488 = vmatprep.subr.mxu0 0.0
    %489 = vmatpush2.msra.mxu0 %v115
    %490 = vmatprep.subr.mxu0 0.0
    %491 = vmatpush2.msra.mxu0 %v114
    %492 = vmatprep.mubr.f32.mxu0 %v405
    %493 = vmatmul.mubr.f32.gmra.mxu0 %v404
    %v494 = vpop.f32.mrf.mxu0
    %v495 = vadd.f32 0.0, %v494
    %v496 = vpop.f32.mrf.mxu0
    %497 = vmatprep.mubr.f32.mxu0 %v408
    %498 = vmatmul.mubr.f32.gmra.mxu0 %v407
    %v499 = vpop.f32.mrf.mxu0
    %v500 = vadd.f32 0.0, %v499
    %v501 = vpop.f32.mrf.mxu0
    %502 = vmatprep.mubr.f32.mxu0 %v411
    %503 = vmatmul.mubr.f32.gmra.mxu0 %v410
    %v504 = vpop.f32.mrf.mxu0
    %v505 = vadd.f32 0.0, %v504
    %v506 = vpop.f32.mrf.mxu0
    %507 = vmatprep.mubr.f32.mxu0 %v414
    %508 = vmatmul.mubr.f32.gmra.mxu0 %v413
    %v509 = vpop.f32.mrf.mxu0
    %v510 = vadd.f32 0.0, %v509
    %v511 = vpop.f32.mrf.mxu0
    %512 = vmatprep.mubr.f32.mxu0 %v417
    %513 = vmatmul.mubr.f32.gmra.mxu0 %v416
    %v514 = vpop.f32.mrf.mxu0
    %v515 = vadd.f32 0.0, %v514
    %v516 = vpop.f32.mrf.mxu0
    %517 = vmatprep.mubr.f32.mxu0 %v420
    %518 = vmatmul.mubr.f32.gmra.mxu0 %v419
    %v519 = vpop.f32.mrf.mxu0
    %v520 = vadd.f32 0.0, %v519
    %v521 = vpop.f32.mrf.mxu0
    %522 = vmatprep.mubr.f32.mxu0 %v423
    %523 = vmatmul.mubr.f32.gmra.mxu0 %v422
    %v524 = vpop.f32.mrf.mxu0
    %v525 = vadd.f32 0.0, %v524
    %v526 = vpop.f32.mrf.mxu0
    %527 = vmatprep.mubr.f32.mxu0 %v426
    %528 = vmatmul.mubr.f32.gmra.mxu0 %v425
    %v529 = vpop.f32.mrf.mxu0
    %v530 = vadd.f32 0.0, %v529
    %v531 = vpop.f32.mrf.mxu0
    %532 = vdwg.mxu0
    %533 = vmatprep.subr.mxu0 0.0
    %534 = vmatpush1.msra.mxu0 %v145
    %535 = vmatprep.subr.mxu0 0.0
    %536 = vmatpush1.msra.mxu0 %v144
    %537 = vmatprep.subr.mxu0 0.0
    %538 = vmatpush1.msra.mxu0 %v143
    %539 = vmatprep.subr.mxu0 0.0
    %540 = vmatpush1.msra.mxu0 %v142
    %541 = vmatprep.subr.mxu0 0.0
    %542 = vmatpush1.msra.mxu0 %v141
    %543 = vmatprep.subr.mxu0 0.0
    %544 = vmatpush1.msra.mxu0 %v140
    %545 = vmatprep.subr.mxu0 0.0
    %546 = vmatpush1.msra.mxu0 %v139
    %547 = vmatprep.subr.mxu0 0.0
    %548 = vmatpush1.msra.mxu0 %v138
    %549 = vmatprep.subr.mxu0 0.0
    %550 = vmatpush1.msra.mxu0 %v137
    %551 = vmatprep.subr.mxu0 0.0
    %552 = vmatpush1.msra.mxu0 %v136
    %553 = vmatprep.subr.mxu0 0.0
    %554 = vmatpush1.msra.mxu0 %v135
    %555 = vmatprep.subr.mxu0 0.0
    %556 = vmatpush1.msra.mxu0 %v134
    %557 = vmatprep.subr.mxu0 0.0
    %558 = vmatpush1.msra.mxu0 %v133
    %559 = vmatprep.subr.mxu0 0.0
    %560 = vmatpush1.msra.mxu0 %v132
    %561 = vmatprep.subr.mxu0 0.0
    %562 = vmatpush1.msra.mxu0 %v131
    %563 = vmatprep.subr.mxu0 0.0
    %564 = vmatpush1.msra.mxu0 %v130
    %565 = vmatprep.subr.mxu0 0.0
    %566 = vmatpush2.msra.mxu0 0.0
    %567 = vmatprep.subr.mxu0 0.0
    %568 = vmatpush2.msra.mxu0 0.0
    %569 = vmatprep.subr.mxu0 0.0
    %570 = vmatpush2.msra.mxu0 0.0
    %571 = vmatprep.subr.mxu0 0.0
    %572 = vmatpush2.msra.mxu0 0.0
    %573 = vmatprep.subr.mxu0 0.0
    %574 = vmatpush2.msra.mxu0 0.0
    %575 = vmatprep.subr.mxu0 0.0
    %576 = vmatpush2.msra.mxu0 0.0
    %577 = vmatprep.subr.mxu0 0.0
    %578 = vmatpush2.msra.mxu0 0.0
    %579 = vmatprep.subr.mxu0 0.0
    %580 = vmatpush2.msra.mxu0 0.0
    %581 = vmatprep.subr.mxu0 0.0
    %582 = vmatpush2.msra.mxu0 0.0
    %583 = vmatprep.subr.mxu0 0.0
    %584 = vmatpush2.msra.mxu0 0.0
    %585 = vmatprep.subr.mxu0 0.0
    %586 = vmatpush2.msra.mxu0 0.0
    %587 = vmatprep.subr.mxu0 0.0
    %588 = vmatpush2.msra.mxu0 0.0
    %589 = vmatprep.subr.mxu0 0.0
    %590 = vmatpush2.msra.mxu0 0.0
    %591 = vmatprep.subr.mxu0 0.0
    %592 = vmatpush2.msra.mxu0 0.0
    %593 = vmatprep.subr.mxu0 0.0
    %594 = vmatpush2.msra.mxu0 0.0
    %595 = vmatprep.subr.mxu0 0.0
    %596 = vmatpush2.msra.mxu0 0.0
    %597 = vmatprep.mubr.f32.mxu0 0.0
    %598 = vmatmul.mubr.f32.gmra.mxu0 %v406
    %v599 = vpop.f32.mrf.mxu0
    %v600 = vadd.f32 %v495, %v599
    %v601 = vpop.f32.mrf.mxu0
    %602 = vmatprep.mubr.f32.mxu0 0.0
    %603 = vmatmul.mubr.f32.gmra.mxu0 %v409
    %v604 = vpop.f32.mrf.mxu0
    %v605 = vadd.f32 %v500, %v604
    %v606 = vpop.f32.mrf.mxu0
    %607 = vmatprep.mubr.f32.mxu0 0.0
    %608 = vmatmul.mubr.f32.gmra.mxu0 %v412
    %v609 = vpop.f32.mrf.mxu0
    %v610 = vadd.f32 %v505, %v609
    %v611 = vpop.f32.mrf.mxu0
    %612 = vmatprep.mubr.f32.mxu0 0.0
    %613 = vmatmul.mubr.f32.gmra.mxu0 %v415
    %v614 = vpop.f32.mrf.mxu0
    %v615 = vadd.f32 %v510, %v614
    %v616 = vpop.f32.mrf.mxu0
    %617 = vmatprep.mubr.f32.mxu0 0.0
    %618 = vmatmul.mubr.f32.gmra.mxu0 %v418
    %v619 = vpop.f32.mrf.mxu0
    %v620 = vadd.f32 %v515, %v619
    %v621 = vpop.f32.mrf.mxu0
    %622 = vmatprep.mubr.f32.mxu0 0.0
    %623 = vmatmul.mubr.f32.gmra.mxu0 %v421
    %v624 = vpop.f32.mrf.mxu0
    %v625 = vadd.f32 %v520, %v624
    %v626 = vpop.f32.mrf.mxu0
    %627 = vmatprep.mubr.f32.mxu0 0.0
    %628 = vmatmul.mubr.f32.gmra.mxu0 %v424
    %v629 = vpop.f32.mrf.mxu0
    %v630 = vadd.f32 %v525, %v629
    %v631 = vpop.f32.mrf.mxu0
    %632 = vmatprep.mubr.f32.mxu0 0.0
    %633 = vmatmul.mubr.f32.gmra.mxu0 %v427
    %v634 = vpop.f32.mrf.mxu0
    %v635 = vadd.f32 %v530, %v634
    %v636 = vpop.f32.mrf.mxu0
    %637 = vdwg.mxu0
    %v638 = vmul.f32 %v366, 0.0052083335
    %v639 = vmul.f32 %v371, 0.0052083335
    %v640 = vmul.f32 %v376, 0.0052083335
    %v641 = vmul.f32 %v381, 0.0052083335
    %v642 = vmul.f32 %v386, 0.0052083335
    %v643 = vmul.f32 %v391, 0.0052083335
    %v644 = vmul.f32 %v396, 0.0052083335
    %v645 = vmul.f32 %v401, 0.0052083335
    %v646 = vmul.f32 %v600, 0.0052083335
    %v647 = vmul.f32 %v605, 0.0052083335
    %v648 = vmul.f32 %v610, 0.0052083335
    %v649 = vmul.f32 %v615, 0.0052083335
    %v650 = vmul.f32 %v620, 0.0052083335
    %v651 = vmul.f32 %v625, 0.0052083335
    %v652 = vmul.f32 %v630, 0.0052083335
    %v653 = vmul.f32 %v635, 0.0052083335
    %v654 = vmul.f32 %v638, %v638
    %v655 = vmul.f32 %v639, %v639
    %v656 = vmul.f32 %v640, %v640
    %v657 = vmul.f32 %v641, %v641
    %v658 = vmul.f32 %v642, %v642
    %v659 = vmul.f32 %v643, %v643
    %v660 = vmul.f32 %v644, %v644
    %v661 = vmul.f32 %v645, %v645
    %v662 = vsub.f32 %v646, %v654
    %v663 = vsub.f32 %v647, %v655
    %v664 = vsub.f32 %v648, %v656
    %v665 = vsub.f32 %v649, %v657
    %v666 = vsub.f32 %v650, %v658
    %v667 = vsub.f32 %v651, %v659
    %v668 = vsub.f32 %v652, %v660
    %v669 = vsub.f32 %v653, %v661
    %v670 = vadd.f32 %v662, 1e-06
    %v671 = vadd.f32 %v663, 1e-06
    %v672 = vadd.f32 %v664, 1e-06
    %v673 = vadd.f32 %v665, 1e-06
    %v674 = vadd.f32 %v666, 1e-06
    %v675 = vadd.f32 %v667, 1e-06
    %v676 = vadd.f32 %v668, 1e-06
    %v677 = vadd.f32 %v669, 1e-06
    %v678 = vrsqrt.pop %v670
    %v679 = vrsqrt.pop %v671
    %v680 = vrsqrt.pop %v672
    %v681 = vrsqrt.pop %v673
    %v682 = vrsqrt.pop %v674
    %v683 = vrsqrt.pop %v675
    %v684 = vrsqrt.pop %v676
    %v685 = vrsqrt.pop %v677
    %686 = vmatprep.subr.mxu0 %v192
    %687 = vmatpush1.msra.mxu0 %v191
    %688 = vmatprep.subr.mxu0 %v189
    %689 = vmatpush1.msra.mxu0 %v188
    %690 = vmatprep.subr.mxu0 %v186
    %691 = vmatpush1.msra.mxu0 %v185
    %692 = vmatprep.subr.mxu0 %v183
    %693 = vmatpush1.msra.mxu0 %v182
    %694 = vmatprep.subr.mxu0 %v180
    %695 = vmatpush1.msra.mxu0 %v179
    %696 = vmatprep.subr.mxu0 %v177
    %697 = vmatpush1.msra.mxu0 %v176
    %698 = vmatprep.subr.mxu0 %v174
    %699 = vmatpush1.msra.mxu0 %v173
    %700 = vmatprep.subr.mxu0 %v171
    %701 = vmatpush1.msra.mxu0 %v170
    %702 = vmatprep.subr.mxu0 %v168
    %703 = vmatpush1.msra.mxu0 %v167
    %704 = vmatprep.subr.mxu0 %v165
    %705 = vmatpush1.msra.mxu0 %v164
    %706 = vmatprep.subr.mxu0 %v162
    %707 = vmatpush1.msra.mxu0 %v161
    %708 = vmatprep.subr.mxu0 %v159
    %709 = vmatpush1.msra.mxu0 %v158
    %710 = vmatprep.subr.mxu0 %v156
    %711 = vmatpush1.msra.mxu0 %v155
    %712 = vmatprep.subr.mxu0 %v153
    %713 = vmatpush1.msra.mxu0 %v152
    %714 = vmatprep.subr.mxu0 %v150
    %715 = vmatpush1.msra.mxu0 %v149
    %716 = vmatprep.subr.mxu0 %v147
    %717 = vmatpush1.msra.mxu0 %v146
    %718 = vmatprep.subr.mxu0 0.0
    %719 = vmatpush2.msra.mxu0 0.0
    %720 = vmatprep.subr.mxu0 0.0
    %721 = vmatpush2.msra.mxu0 0.0
    %722 = vmatprep.subr.mxu0 0.0
    %723 = vmatpush2.msra.mxu0 0.0
    %724 = vmatprep.subr.mxu0 0.0
    %725 = vmatpush2.msra.mxu0 0.0
    %726 = vmatprep.subr.mxu0 0.0
    %727 = vmatpush2.msra.mxu0 0.0
    %728 = vmatprep.subr.mxu0 0.0
    %729 = vmatpush2.msra.mxu0 0.0
    %730 = vmatprep.subr.mxu0 0.0
    %731 = vmatpush2.msra.mxu0 0.0
    %732 = vmatprep.subr.mxu0 0.0
    %733 = vmatpush2.msra.mxu0 0.0
    %734 = vmatprep.subr.mxu0 0.0
    %735 = vmatpush2.msra.mxu0 0.0
    %736 = vmatprep.subr.mxu0 0.0
    %737 = vmatpush2.msra.mxu0 0.0
    %738 = vmatprep.subr.mxu0 0.0
    %739 = vmatpush2.msra.mxu0 0.0
    %740 = vmatprep.subr.mxu0 0.0
    %741 = vmatpush2.msra.mxu0 0.0
    %742 = vmatprep.subr.mxu0 0.0
    %743 = vmatpush2.msra.mxu0 0.0
    %744 = vmatprep.subr.mxu0 0.0
    %745 = vmatpush2.msra.mxu0 0.0
    %746 = vmatprep.subr.mxu0 0.0
    %747 = vmatpush2.msra.mxu0 0.0
    %748 = vmatprep.subr.mxu0 0.0
    %749 = vmatpush2.msra.mxu0 0.0
    %750 = vmatprep.mubr.f32.mxu0 0.0
    %751 = vmatmul.mubr.f32.gmra.mxu0 %v638
    %v752 = vpop.f32.mrf.mxu0
    %v753 = vadd.f32 0.0, %v752
    %v754 = vpop.f32.mrf.mxu0
    %v755 = vadd.f32 0.0, %v754
    %756 = vmatprep.mubr.f32.mxu0 0.0
    %757 = vmatmul.mubr.f32.gmra.mxu0 %v639
    %v758 = vpop.f32.mrf.mxu0
    %v759 = vadd.f32 0.0, %v758
    %v760 = vpop.f32.mrf.mxu0
    %v761 = vadd.f32 0.0, %v760
    %762 = vmatprep.mubr.f32.mxu0 0.0
    %763 = vmatmul.mubr.f32.gmra.mxu0 %v640
    %v764 = vpop.f32.mrf.mxu0
    %v765 = vadd.f32 0.0, %v764
    %v766 = vpop.f32.mrf.mxu0
    %v767 = vadd.f32 0.0, %v766
    %768 = vmatprep.mubr.f32.mxu0 0.0
    %769 = vmatmul.mubr.f32.gmra.mxu0 %v641
    %v770 = vpop.f32.mrf.mxu0
    %v771 = vadd.f32 0.0, %v770
    %v772 = vpop.f32.mrf.mxu0
    %v773 = vadd.f32 0.0, %v772
    %774 = vmatprep.mubr.f32.mxu0 0.0
    %775 = vmatmul.mubr.f32.gmra.mxu0 %v642
    %v776 = vpop.f32.mrf.mxu0
    %v777 = vadd.f32 0.0, %v776
    %v778 = vpop.f32.mrf.mxu0
    %v779 = vadd.f32 0.0, %v778
    %780 = vmatprep.mubr.f32.mxu0 0.0
    %781 = vmatmul.mubr.f32.gmra.mxu0 %v643
    %v782 = vpop.f32.mrf.mxu0
    %v783 = vadd.f32 0.0, %v782
    %v784 = vpop.f32.mrf.mxu0
    %v785 = vadd.f32 0.0, %v784
    %786 = vmatprep.mubr.f32.mxu0 0.0
    %787 = vmatmul.mubr.f32.gmra.mxu0 %v644
    %v788 = vpop.f32.mrf.mxu0
    %v789 = vadd.f32 0.0, %v788
    %v790 = vpop.f32.mrf.mxu0
    %v791 = vadd.f32 0.0, %v790
    %792 = vmatprep.mubr.f32.mxu0 0.0
    %793 = vmatmul.mubr.f32.gmra.mxu0 %v645
    %v794 = vpop.f32.mrf.mxu0
    %v795 = vadd.f32 0.0, %v794
    %v796 = vpop.f32.mrf.mxu0
    %v797 = vadd.f32 0.0, %v796
    %798 = vdwg.mxu0
    %799 = vmatprep.subr.mxu0 0.0
    %800 = vmatpush1.msra.mxu0 %v193
    %801 = vmatprep.subr.mxu0 0.0
    %802 = vmatpush1.msra.mxu0 %v190
    %803 = vmatprep.subr.mxu0 0.0
    %804 = vmatpush1.msra.mxu0 %v187
    %805 = vmatprep.subr.mxu0 0.0
    %806 = vmatpush1.msra.mxu0 %v184
    %807 = vmatprep.subr.mxu0 0.0
    %808 = vmatpush1.msra.mxu0 %v181
    %809 = vmatprep.subr.mxu0 0.0
    %810 = vmatpush1.msra.mxu0 %v178
    %811 = vmatprep.subr.mxu0 0.0
    %812 = vmatpush1.msra.mxu0 %v175
    %813 = vmatprep.subr.mxu0 0.0
    %814 = vmatpush1.msra.mxu0 %v172
    %815 = vmatprep.subr.mxu0 0.0
    %816 = vmatpush1.msra.mxu0 %v169
    %817 = vmatprep.subr.mxu0 0.0
    %818 = vmatpush1.msra.mxu0 %v166
    %819 = vmatprep.subr.mxu0 0.0
    %820 = vmatpush1.msra.mxu0 %v163
    %821 = vmatprep.subr.mxu0 0.0
    %822 = vmatpush1.msra.mxu0 %v160
    %823 = vmatprep.subr.mxu0 0.0
    %824 = vmatpush1.msra.mxu0 %v157
    %825 = vmatprep.subr.mxu0 0.0
    %826 = vmatpush1.msra.mxu0 %v154
    %827 = vmatprep.subr.mxu0 0.0
    %828 = vmatpush1.msra.mxu0 %v151
    %829 = vmatprep.subr.mxu0 0.0
    %830 = vmatpush1.msra.mxu0 %v148
    %831 = vmatprep.subr.mxu0 0.0
    %832 = vmatpush2.msra.mxu0 0.0
    %833 = vmatprep.subr.mxu0 0.0
    %834 = vmatpush2.msra.mxu0 0.0
    %835 = vmatprep.subr.mxu0 0.0
    %836 = vmatpush2.msra.mxu0 0.0
    %837 = vmatprep.subr.mxu0 0.0
    %838 = vmatpush2.msra.mxu0 0.0
    %839 = vmatprep.subr.mxu0 0.0
    %840 = vmatpush2.msra.mxu0 0.0
    %841 = vmatprep.subr.mxu0 0.0
    %842 = vmatpush2.msra.mxu0 0.0
    %843 = vmatprep.subr.mxu0 0.0
    %844 = vmatpush2.msra.mxu0 0.0
    %845 = vmatprep.subr.mxu0 0.0
    %846 = vmatpush2.msra.mxu0 0.0
    %847 = vmatprep.subr.mxu0 0.0
    %848 = vmatpush2.msra.mxu0 0.0
    %849 = vmatprep.subr.mxu0 0.0
    %850 = vmatpush2.msra.mxu0 0.0
    %851 = vmatprep.subr.mxu0 0.0
    %852 = vmatpush2.msra.mxu0 0.0
    %853 = vmatprep.subr.mxu0 0.0
    %854 = vmatpush2.msra.mxu0 0.0
    %855 = vmatprep.subr.mxu0 0.0
    %856 = vmatpush2.msra.mxu0 0.0
    %857 = vmatprep.subr.mxu0 0.0
    %858 = vmatpush2.msra.mxu0 0.0
    %859 = vmatprep.subr.mxu0 0.0
    %860 = vmatpush2.msra.mxu0 0.0
    %861 = vmatprep.subr.mxu0 0.0
    %862 = vmatpush2.msra.mxu0 0.0
    %863 = vmatprep.mubr.f32.mxu0 0.0
    %864 = vmatmul.mubr.f32.gmra.mxu0 %v638
    %v865 = vpop.f32.mrf.mxu0
    %v866 = vadd.f32 0.0, %v865
    %v867 = vpop.f32.mrf.mxu0
    %868 = vmatprep.mubr.f32.mxu0 0.0
    %869 = vmatmul.mubr.f32.gmra.mxu0 %v639
    %v870 = vpop.f32.mrf.mxu0
    %v871 = vadd.f32 0.0, %v870
    %v872 = vpop.f32.mrf.mxu0
    %873 = vmatprep.mubr.f32.mxu0 0.0
    %874 = vmatmul.mubr.f32.gmra.mxu0 %v640
    %v875 = vpop.f32.mrf.mxu0
    %v876 = vadd.f32 0.0, %v875
    %v877 = vpop.f32.mrf.mxu0
    %878 = vmatprep.mubr.f32.mxu0 0.0
    %879 = vmatmul.mubr.f32.gmra.mxu0 %v641
    %v880 = vpop.f32.mrf.mxu0
    %v881 = vadd.f32 0.0, %v880
    %v882 = vpop.f32.mrf.mxu0
    %883 = vmatprep.mubr.f32.mxu0 0.0
    %884 = vmatmul.mubr.f32.gmra.mxu0 %v642
    %v885 = vpop.f32.mrf.mxu0
    %v886 = vadd.f32 0.0, %v885
    %v887 = vpop.f32.mrf.mxu0
    %888 = vmatprep.mubr.f32.mxu0 0.0
    %889 = vmatmul.mubr.f32.gmra.mxu0 %v643
    %v890 = vpop.f32.mrf.mxu0
    %v891 = vadd.f32 0.0, %v890
    %v892 = vpop.f32.mrf.mxu0
    %893 = vmatprep.mubr.f32.mxu0 0.0
    %894 = vmatmul.mubr.f32.gmra.mxu0 %v644
    %v895 = vpop.f32.mrf.mxu0
    %v896 = vadd.f32 0.0, %v895
    %v897 = vpop.f32.mrf.mxu0
    %898 = vmatprep.mubr.f32.mxu0 0.0
    %899 = vmatmul.mubr.f32.gmra.mxu0 %v645
    %v900 = vpop.f32.mrf.mxu0
    %v901 = vadd.f32 0.0, %v900
    %v902 = vpop.f32.mrf.mxu0
    %903 = vdwg.mxu0
    %904 = vmatprep.subr.mxu0 %v192
    %905 = vmatpush1.msra.mxu0 %v191
    %906 = vmatprep.subr.mxu0 %v189
    %907 = vmatpush1.msra.mxu0 %v188
    %908 = vmatprep.subr.mxu0 %v186
    %909 = vmatpush1.msra.mxu0 %v185
    %910 = vmatprep.subr.mxu0 %v183
    %911 = vmatpush1.msra.mxu0 %v182
    %912 = vmatprep.subr.mxu0 %v180
    %913 = vmatpush1.msra.mxu0 %v179
    %914 = vmatprep.subr.mxu0 %v177
    %915 = vmatpush1.msra.mxu0 %v176
    %916 = vmatprep.subr.mxu0 %v174
    %917 = vmatpush1.msra.mxu0 %v173
    %918 = vmatprep.subr.mxu0 %v171
    %919 = vmatpush1.msra.mxu0 %v170
    %920 = vmatprep.subr.mxu0 %v168
    %921 = vmatpush1.msra.mxu0 %v167
    %922 = vmatprep.subr.mxu0 %v165
    %923 = vmatpush1.msra.mxu0 %v164
    %924 = vmatprep.subr.mxu0 %v162
    %925 = vmatpush1.msra.mxu0 %v161
    %926 = vmatprep.subr.mxu0 %v159
    %927 = vmatpush1.msra.mxu0 %v158
    %928 = vmatprep.subr.mxu0 %v156
    %929 = vmatpush1.msra.mxu0 %v155
    %930 = vmatprep.subr.mxu0 %v153
    %931 = vmatpush1.msra.mxu0 %v152
    %932 = vmatprep.subr.mxu0 %v150
    %933 = vmatpush1.msra.mxu0 %v149
    %934 = vmatprep.subr.mxu0 %v147
    %935 = vmatpush1.msra.mxu0 %v146
    %936 = vmatprep.subr.mxu0 0.0
    %937 = vmatpush2.msra.mxu0 0.0
    %938 = vmatprep.subr.mxu0 0.0
    %939 = vmatpush2.msra.mxu0 0.0
    %940 = vmatprep.subr.mxu0 0.0
    %941 = vmatpush2.msra.mxu0 0.0
    %942 = vmatprep.subr.mxu0 0.0
    %943 = vmatpush2.msra.mxu0 0.0
    %944 = vmatprep.subr.mxu0 0.0
    %945 = vmatpush2.msra.mxu0 0.0
    %946 = vmatprep.subr.mxu0 0.0
    %947 = vmatpush2.msra.mxu0 0.0
    %948 = vmatprep.subr.mxu0 0.0
    %949 = vmatpush2.msra.mxu0 0.0
    %950 = vmatprep.subr.mxu0 0.0
    %951 = vmatpush2.msra.mxu0 0.0
    %952 = vmatprep.subr.mxu0 0.0
    %953 = vmatpush2.msra.mxu0 0.0
    %954 = vmatprep.subr.mxu0 0.0
    %955 = vmatpush2.msra.mxu0 0.0
    %956 = vmatprep.subr.mxu0 0.0
    %957 = vmatpush2.msra.mxu0 0.0
    %958 = vmatprep.subr.mxu0 0.0
    %959 = vmatpush2.msra.mxu0 0.0
    %960 = vmatprep.subr.mxu0 0.0
    %961 = vmatpush2.msra.mxu0 0.0
    %962 = vmatprep.subr.mxu0 0.0
    %963 = vmatpush2.msra.mxu0 0.0
    %964 = vmatprep.subr.mxu0 0.0
    %965 = vmatpush2.msra.mxu0 0.0
    %966 = vmatprep.subr.mxu0 0.0
    %967 = vmatpush2.msra.mxu0 0.0
    %968 = vmatprep.mubr.f32.mxu0 0.0
    %969 = vmatmul.mubr.f32.gmra.mxu0 %v678
    %v970 = vpop.f32.mrf.mxu0
    %v971 = vadd.f32 0.0, %v970
    %v972 = vpop.f32.mrf.mxu0
    %v973 = vadd.f32 0.0, %v972
    %974 = vmatprep.mubr.f32.mxu0 0.0
    %975 = vmatmul.mubr.f32.gmra.mxu0 %v679
    %v976 = vpop.f32.mrf.mxu0
    %v977 = vadd.f32 0.0, %v976
    %v978 = vpop.f32.mrf.mxu0
    %v979 = vadd.f32 0.0, %v978
    %980 = vmatprep.mubr.f32.mxu0 0.0
    %981 = vmatmul.mubr.f32.gmra.mxu0 %v680
    %v982 = vpop.f32.mrf.mxu0
    %v983 = vadd.f32 0.0, %v982
    %v984 = vpop.f32.mrf.mxu0
    %v985 = vadd.f32 0.0, %v984
    %986 = vmatprep.mubr.f32.mxu0 0.0
    %987 = vmatmul.mubr.f32.gmra.mxu0 %v681
    %v988 = vpop.f32.mrf.mxu0
    %v989 = vadd.f32 0.0, %v988
    %v990 = vpop.f32.mrf.mxu0
    %v991 = vadd.f32 0.0, %v990
    %992 = vmatprep.mubr.f32.mxu0 0.0
    %993 = vmatmul.mubr.f32.gmra.mxu0 %v682
    %v994 = vpop.f32.mrf.mxu0
    %v995 = vadd.f32 0.0, %v994
    %v996 = vpop.f32.mrf.mxu0
    %v997 = vadd.f32 0.0, %v996
    %998 = vmatprep.mubr.f32.mxu0 0.0
    %999 = vmatmul.mubr.f32.gmra.mxu0 %v683
    %v1000 = vpop.f32.mrf.mxu0
    %v1001 = vadd.f32 0.0, %v1000
    %v1002 = vpop.f32.mrf.mxu0
    %v1003 = vadd.f32 0.0, %v1002
    %1004 = vmatprep.mubr.f32.mxu0 0.0
    %1005 = vmatmul.mubr.f32.gmra.mxu0 %v684
    %v1006 = vpop.f32.mrf.mxu0
    %v1007 = vadd.f32 0.0, %v1006
    %v1008 = vpop.f32.mrf.mxu0
    %v1009 = vadd.f32 0.0, %v1008
    %1010 = vmatprep.mubr.f32.mxu0 0.0
    %1011 = vmatmul.mubr.f32.gmra.mxu0 %v685
    %v1012 = vpop.f32.mrf.mxu0
    %v1013 = vadd.f32 0.0, %v1012
    %v1014 = vpop.f32.mrf.mxu0
    %v1015 = vadd.f32 0.0, %v1014
    %1016 = vdwg.mxu0
    %1017 = vmatprep.subr.mxu0 0.0
    %1018 = vmatpush1.msra.mxu0 %v193
    %1019 = vmatprep.subr.mxu0 0.0
    %1020 = vmatpush1.msra.mxu0 %v190
    %1021 = vmatprep.subr.mxu0 0.0
    %1022 = vmatpush1.msra.mxu0 %v187
    %1023 = vmatprep.subr.mxu0 0.0
    %1024 = vmatpush1.msra.mxu0 %v184
    %1025 = vmatprep.subr.mxu0 0.0
    %1026 = vmatpush1.msra.mxu0 %v181
    %1027 = vmatprep.subr.mxu0 0.0
    %1028 = vmatpush1.msra.mxu0 %v178
    %1029 = vmatprep.subr.mxu0 0.0
    %1030 = vmatpush1.msra.mxu0 %v175
    %1031 = vmatprep.subr.mxu0 0.0
    %1032 = vmatpush1.msra.mxu0 %v172
    %1033 = vmatprep.subr.mxu0 0.0
    %1034 = vmatpush1.msra.mxu0 %v169
    %1035 = vmatprep.subr.mxu0 0.0
    %1036 = vmatpush1.msra.mxu0 %v166
    %1037 = vmatprep.subr.mxu0 0.0
    %1038 = vmatpush1.msra.mxu0 %v163
    %1039 = vmatprep.subr.mxu0 0.0
    %1040 = vmatpush1.msra.mxu0 %v160
    %1041 = vmatprep.subr.mxu0 0.0
    %1042 = vmatpush1.msra.mxu0 %v157
    %1043 = vmatprep.subr.mxu0 0.0
    %1044 = vmatpush1.msra.mxu0 %v154
    %1045 = vmatprep.subr.mxu0 0.0
    %1046 = vmatpush1.msra.mxu0 %v151
    %1047 = vmatprep.subr.mxu0 0.0
    %1048 = vmatpush1.msra.mxu0 %v148
    %1049 = vmatprep.subr.mxu0 0.0
    %1050 = vmatpush2.msra.mxu0 0.0
    %1051 = vmatprep.subr.mxu0 0.0
    %1052 = vmatpush2.msra.mxu0 0.0
    %1053 = vmatprep.subr.mxu0 0.0
    %1054 = vmatpush2.msra.mxu0 0.0
    %1055 = vmatprep.subr.mxu0 0.0
    %1056 = vmatpush2.msra.mxu0 0.0
    %1057 = vmatprep.subr.mxu0 0.0
    %1058 = vmatpush2.msra.mxu0 0.0
    %1059 = vmatprep.subr.mxu0 0.0
    %1060 = vmatpush2.msra.mxu0 0.0
    %1061 = vmatprep.subr.mxu0 0.0
    %1062 = vmatpush2.msra.mxu0 0.0
    %1063 = vmatprep.subr.mxu0 0.0
    %1064 = vmatpush2.msra.mxu0 0.0
    %1065 = vmatprep.subr.mxu0 0.0
    %1066 = vmatpush2.msra.mxu0 0.0
    %1067 = vmatprep.subr.mxu0 0.0
    %1068 = vmatpush2.msra.mxu0 0.0
    %1069 = vmatprep.subr.mxu0 0.0
    %1070 = vmatpush2.msra.mxu0 0.0
    %1071 = vmatprep.subr.mxu0 0.0
    %1072 = vmatpush2.msra.mxu0 0.0
    %1073 = vmatprep.subr.mxu0 0.0
    %1074 = vmatpush2.msra.mxu0 0.0
    %1075 = vmatprep.subr.mxu0 0.0
    %1076 = vmatpush2.msra.mxu0 0.0
    %1077 = vmatprep.subr.mxu0 0.0
    %1078 = vmatpush2.msra.mxu0 0.0
    %1079 = vmatprep.subr.mxu0 0.0
    %1080 = vmatpush2.msra.mxu0 0.0
    %1081 = vmatprep.mubr.f32.mxu0 0.0
    %1082 = vmatmul.mubr.f32.gmra.mxu0 %v678
    %v1083 = vpop.f32.mrf.mxu0
    %v1084 = vadd.f32 0.0, %v1083
    %v1085 = vpop.f32.mrf.mxu0
    %1086 = vmatprep.mubr.f32.mxu0 0.0
    %1087 = vmatmul.mubr.f32.gmra.mxu0 %v679
    %v1088 = vpop.f32.mrf.mxu0
    %v1089 = vadd.f32 0.0, %v1088
    %v1090 = vpop.f32.mrf.mxu0
    %1091 = vmatprep.mubr.f32.mxu0 0.0
    %1092 = vmatmul.mubr.f32.gmra.mxu0 %v680
    %v1093 = vpop.f32.mrf.mxu0
    %v1094 = vadd.f32 0.0, %v1093
    %v1095 = vpop.f32.mrf.mxu0
    %1096 = vmatprep.mubr.f32.mxu0 0.0
    %1097 = vmatmul.mubr.f32.gmra.mxu0 %v681
    %v1098 = vpop.f32.mrf.mxu0
    %v1099 = vadd.f32 0.0, %v1098
    %v1100 = vpop.f32.mrf.mxu0
    %1101 = vmatprep.mubr.f32.mxu0 0.0
    %1102 = vmatmul.mubr.f32.gmra.mxu0 %v682
    %v1103 = vpop.f32.mrf.mxu0
    %v1104 = vadd.f32 0.0, %v1103
    %v1105 = vpop.f32.mrf.mxu0
    %1106 = vmatprep.mubr.f32.mxu0 0.0
    %1107 = vmatmul.mubr.f32.gmra.mxu0 %v683
    %v1108 = vpop.f32.mrf.mxu0
    %v1109 = vadd.f32 0.0, %v1108
    %v1110 = vpop.f32.mrf.mxu0
    %1111 = vmatprep.mubr.f32.mxu0 0.0
    %1112 = vmatmul.mubr.f32.gmra.mxu0 %v684
    %v1113 = vpop.f32.mrf.mxu0
    %v1114 = vadd.f32 0.0, %v1113
    %v1115 = vpop.f32.mrf.mxu0
    %1116 = vmatprep.mubr.f32.mxu0 0.0
    %1117 = vmatmul.mubr.f32.gmra.mxu0 %v685
    %v1118 = vpop.f32.mrf.mxu0
    %v1119 = vadd.f32 0.0, %v1118
    %v1120 = vpop.f32.mrf.mxu0
    %1121 = vdwg.mxu0
    %v1122 = vld [vmem:[#allocation5] sm:$0x7]
    %v1123 = vld [vmem:[%s2] sm:$0x7]
    %v1124 = vsub.f32 %v74, %v753
    %v1125 = vsub.f32 %v75, %v755
    %v1126 = vsub.f32 %v76, %v866
    %v1127 = vsub.f32 %v77, %v759
    %v1128 = vsub.f32 %v78, %v761
    %v1129 = vsub.f32 %v79, %v871
    %v1130 = vsub.f32 %v80, %v765
    %v1131 = vsub.f32 %v81, %v767
    %v1132 = vsub.f32 %v82, %v876
    %v1133 = vsub.f32 %v83, %v771
    %v1134 = vsub.f32 %v84, %v773
    %v1135 = vsub.f32 %v85, %v881
    %v1136 = vsub.f32 %v86, %v777
    %v1137 = vsub.f32 %v87, %v779
    %v1138 = vsub.f32 %v88, %v886
    %v1139 = vsub.f32 %v89, %v783
    %v1140 = vsub.f32 %v90, %v785
    %v1141 = vsub.f32 %v91, %v891
    %v1142 = vsub.f32 %v92, %v789
    %v1143 = vsub.f32 %v93, %v791
    %v1144 = vsub.f32 %v94, %v896
    %v1145 = vsub.f32 %v95, %v795
    %v1146 = vsub.f32 %v96, %v797
    %v1147 = vsub.f32 %v97, %v901
    %v1148 = vmul.f32 %v1124, %v971
    %v1149 = vmul.f32 %v1125, %v973
    %v1150 = vmul.f32 %v1126, %v1084
    %v1151 = vmul.f32 %v1127, %v977
    %v1152 = vmul.f32 %v1128, %v979
    %v1153 = vmul.f32 %v1129, %v1089
    %v1154 = vmul.f32 %v1130, %v983
    %v1155 = vmul.f32 %v1131, %v985
    %v1156 = vmul.f32 %v1132, %v1094
    %v1157 = vmul.f32 %v1133, %v989
    %v1158 = vmul.f32 %v1134, %v991
    %v1159 = vmul.f32 %v1135, %v1099
    %v1160 = vmul.f32 %v1136, %v995
    %v1161 = vmul.f32 %v1137, %v997
    %v1162 = vmul.f32 %v1138, %v1104
    %v1163 = vmul.f32 %v1139, %v1001
    %v1164 = vmul.f32 %v1140, %v1003
    %v1165 = vmul.f32 %v1141, %v1109
    %v1166 = vmul.f32 %v1142, %v1007
    %v1167 = vmul.f32 %v1143, %v1009
    %v1168 = vmul.f32 %v1144, %v1114
    %v1169 = vmul.f32 %v1145, %v1013
    %v1170 = vmul.f32 %v1146, %v1015
    %v1171 = vmul.f32 %v1147, %v1119
    %v1173 = vlaneseq
    %v1174 = vshrl.u32 %v1173, 7
    %v1175 = vsub.s32 0, %v1174
    %v1176 = vrot.slane %v1122, %v1175
    %v1177 = vlaneseq
    %v1178 = vshrl.u32 %v1177, 7
    %v1179 = vsub.s32 1, %v1178
    %v1180 = vrot.slane %v1122, %v1179
    %v1181 = vlaneseq
    %v1182 = vshrl.u32 %v1181, 7
    %v1183 = vsub.s32 2, %v1182
    %v1184 = vrot.slane %v1122, %v1183
    %v1188 = vmul.f32 %v1148, %v1176
    %v1189 = vmul.f32 %v1149, %v1180
    %v1190 = vmul.f32 %v1150, %v1184
    %v1191 = vmul.f32 %v1151, %v1176
    %v1192 = vmul.f32 %v1152, %v1180
    %v1193 = vmul.f32 %v1153, %v1184
    %v1194 = vmul.f32 %v1154, %v1176
    %v1195 = vmul.f32 %v1155, %v1180
    %v1196 = vmul.f32 %v1156, %v1184
    %v1197 = vmul.f32 %v1157, %v1176
    %v1198 = vmul.f32 %v1158, %v1180
    %v1199 = vmul.f32 %v1159, %v1184
    %v1200 = vmul.f32 %v1160, %v1176
    %v1201 = vmul.f32 %v1161, %v1180
    %v1202 = vmul.f32 %v1162, %v1184
    %v1203 = vmul.f32 %v1163, %v1176
    %v1204 = vmul.f32 %v1164, %v1180
    %v1205 = vmul.f32 %v1165, %v1184
    %v1206 = vmul.f32 %v1166, %v1176
    %v1207 = vmul.f32 %v1167, %v1180
    %v1208 = vmul.f32 %v1168, %v1184
    %v1209 = vmul.f32 %v1169, %v1176
    %v1210 = vmul.f32 %v1170, %v1180
    %v1211 = vmul.f32 %v1171, %v1184
    %v1213 = vlaneseq
    %v1214 = vshrl.u32 %v1213, 7
    %v1215 = vsub.s32 0, %v1214
    %v1216 = vrot.slane %v1123, %v1215
    %v1217 = vlaneseq
    %v1218 = vshrl.u32 %v1217, 7
    %v1219 = vsub.s32 1, %v1218
    %v1220 = vrot.slane %v1123, %v1219
    %v1221 = vlaneseq
    %v1222 = vshrl.u32 %v1221, 7
    %v1223 = vsub.s32 2, %v1222
    %v1224 = vrot.slane %v1123, %v1223
    %v1228 = vadd.f32 %v1188, %v1216
    %v1229 = vadd.f32 %v1189, %v1220
    %v1230 = vadd.f32 %v1190, %v1224
    %v1231 = vadd.f32 %v1191, %v1216
    %v1232 = vadd.f32 %v1192, %v1220
    %v1233 = vadd.f32 %v1193, %v1224
    %v1234 = vadd.f32 %v1194, %v1216
    %v1235 = vadd.f32 %v1195, %v1220
    %v1236 = vadd.f32 %v1196, %v1224
    %v1237 = vadd.f32 %v1197, %v1216
    %v1238 = vadd.f32 %v1198, %v1220
    %v1239 = vadd.f32 %v1199, %v1224
    %v1240 = vadd.f32 %v1200, %v1216
    %v1241 = vadd.f32 %v1201, %v1220
    %v1242 = vadd.f32 %v1202, %v1224
    %v1243 = vadd.f32 %v1203, %v1216
    %v1244 = vadd.f32 %v1204, %v1220
    %v1245 = vadd.f32 %v1205, %v1224
    %v1246 = vadd.f32 %v1206, %v1216
    %v1247 = vadd.f32 %v1207, %v1220
    %v1248 = vadd.f32 %v1208, %v1224
    %v1249 = vadd.f32 %v1209, %v1216
    %v1250 = vadd.f32 %v1210, %v1220
    %v1251 = vadd.f32 %v1211, %v1224
    %1252 = vst [vmem:[#allocation10] sm:$0xff] %v1228
    %1253 = vst [vmem:[#allocation10 + $0x8] sm:$0xff] %v1229
    %1254 = vst [vmem:[#allocation10 + $0x10] sm:$0xff] %v1230
    %1255 = vst [vmem:[#allocation10 + $0x18] sm:$0xff] %v1231
    %1256 = vst [vmem:[#allocation10 + $0x20] sm:$0xff] %v1232
    %1257 = vst [vmem:[#allocation10 + $0x28] sm:$0xff] %v1233
    %1258 = vst [vmem:[#allocation10 + $0x30] sm:$0xff] %v1234
    %1259 = vst [vmem:[#allocation10 + $0x38] sm:$0xff] %v1235
    %1260 = vst [vmem:[#allocation10 + $0x40] sm:$0xff] %v1236
    %1261 = vst [vmem:[#allocation10 + $0x48] sm:$0xff] %v1237
    %1262 = vst [vmem:[#allocation10 + $0x50] sm:$0xff] %v1238
    %1263 = vst [vmem:[#allocation10 + $0x58] sm:$0xff] %v1239
    %1264 = vst [vmem:[#allocation10 + $0x60] sm:$0xff] %v1240
    %1265 = vst [vmem:[#allocation10 + $0x68] sm:$0xff] %v1241
    %1266 = vst [vmem:[#allocation10 + $0x70] sm:$0xff] %v1242
    %1267 = vst [vmem:[#allocation10 + $0x78] sm:$0xff] %v1243
    %1268 = vst [vmem:[#allocation10 + $0x80] sm:$0xff] %v1244
    %1269 = vst [vmem:[#allocation10 + $0x88] sm:$0xff] %v1245
    %1270 = vst [vmem:[#allocation10 + $0x90] sm:$0xff] %v1246
    %1271 = vst [vmem:[#allocation10 + $0x98] sm:$0xff] %v1247
    %1272 = vst [vmem:[#allocation10 + $0xa0] sm:$0xff] %v1248
    %1273 = vst [vmem:[#allocation10 + $0xa8] sm:$0xff] %v1249
    %1274 = vst [vmem:[#allocation10 + $0xb0] sm:$0xff] %v1250
    %1275 = vst [vmem:[#allocation10 + $0xb8] sm:$0xff] %v1251
    // Predicated region
    $region38: #{tpu_custom_call.1} parent=1 // pred_check
      _
    $region39: #{tpu_custom_call.1} parent=1 // pred_check_branch
      %1277 = sbr.rel (0) target = $region41
    $region40: #{tpu_custom_call.1} parent=1 // pred_region
      %s1279 = ssub.s32 3072, 3072
      %1280 = vsyncadd [#allocation4], %s1279
      %s1281 = sshll.u32 [#allocation10], 4
      %s1282 = int_to_ptr.vmem [resolvable:$true] %s1281
      %1287 = dma.vmem_to_hbm [thread:$0]  %s1282, 3072, %s5, [#allocation4], 384, 384, 24
    $region41: #{tpu_custom_call.1} parent=1 // pred_fallthru
      _
    // Predicated region
    $region42: #{tpu_custom_call.1} parent=1 // pred_check
      _
    $region43: #{tpu_custom_call.1} parent=1 // pred_check_branch
      %1289 = sbr.rel (0) target = $region45
    $region44: #{tpu_custom_call.1} parent=1 // pred_region
      %1290 = dma.done [#allocation4], 3072
    $region45: #{tpu_custom_call.1} parent=1 // pred_fallthru
      _
    %1291 = vsyncpa [#allocation3], 1
    %1292 = vsyncpa [#allocation6], 1
    %1293 = vsyncpa [#allocation9], 1
    %1294 = vsyncpa [#allocation4], 1

</llo_original>
